<compile_context>
chip_gen: v5e
topology: v5e:2x2
jax: 0.10.0
libtpu: 0.0.40
codegen_flags: <defaults>
</compile_context>

<pallas_src>
import numpy as np
import jax
import jax.numpy as jnp
from jax.experimental import pallas as pl
from jax.experimental.pallas import tpu as pltpu

# Module hyper-parameters (from focalTverskyLoss.__init__ defaults).
SMOOTH = 1.0
ALPHA = 0.7
BETA = 0.3
GAMMA = 0.75
IGNORE_INDEX = [0, 21, 22]


def _make_kernel(C, T, HW, ht, n_t, n_split, ignore_index):
    """Per-(pixel-half, batch, pixel-tile) reduction kernel.

    Block views: labels (1, 1, T) int32, logits (1, C, T) native dtype —
    classes on sublanes, pixels on lanes.  Each step lane-reduces its (C, T)
    partials and accumulates into the resident (1, 1, C, 1) output blocks.
    """
    # Virtual tiles (n_split * ht) may over-cover HW -> need a lane mask.
    needs_mask = (n_split * ht * T) != HW
    has_ignore = len(ignore_index) > 0

    def kernel(lbl_ref, logit_ref, tp_ref, sp_ref, so_ref):
        t = pl.program_id(2)

        @pl.when(t == 0)
        def _init():
            tp_ref[...] = jnp.zeros_like(tp_ref)
            sp_ref[...] = jnp.zeros_like(sp_ref)
            so_ref[...] = jnp.zeros_like(so_ref)

        # Widen to f32 AFTER the DMA (logits travel HBM->VMEM in native dtype).
        logits = logit_ref[0].astype(jnp.float32)          # (C, T)
        lbl = lbl_ref[0]                                    # (1, T) int32

        # Class ids on the sublane axis; ignored classes get sentinel -1 so
        # they can never match a label (no per-element `& keep` needed).
        cls = jax.lax.broadcasted_iota(jnp.int32, (C, 1), 0)
        if has_ignore:
            keep = cls >= 0
            for ig in ignore_index:
                keep = keep & (cls != ig)
            cls_id = jnp.where(keep, cls, -1)               # (C, 1)
            masked = jnp.where(keep, logits, -jnp.inf)      # ignored rows -> -inf
        else:
            cls_id = cls
            masked = logits

        if needs_mask:
            # Global pixel index of every lane in this virtual tile.
            s = pl.program_id(0)
            pix = (s * ht + t) * T + jax.lax.broadcasted_iota(jnp.int32, (1, T), 1)
            valid = pix < HW                                # (1, T)
            # Sentinel -2 never matches any class id -> one-hot row is zero
            # on invalid lanes (cheap: one select per pixel, not per element).
            lbl = jnp.where(valid, lbl, -2)

        # Softmax over the kept classes (sublane axis); ignored rows -> prob 0.
        m = jnp.max(masked, axis=0, keepdims=True)          # (1, T)
        e = jnp.exp(masked - m)                             # (C, T)
        denom = jnp.sum(e, axis=0, keepdims=True)           # (1, T)
        probs = e * pl.reciprocal(denom, approx=False)      # (C, T)

        # One-hot against the (masked) class ids. Pixels labelled with an
        # ignored class get an all-zero row (matches the PyTorch reference).
        onehot = cls_id == lbl                              # (C, T) bool

        if needs_mask:
            # Invalid lanes may carry garbage logits (even NaN/Inf); the
            # select discards them without propagating NaN into the lane sum.
            sp_elem = jnp.where(valid, probs, 0.0)
        else:
            sp_elem = probs
        tp_elem = jnp.where(onehot, probs, 0.0)             # NaN-safe on tails
        so_elem = onehot.astype(jnp.float32)

        # Per-step lane reduction into tiny resident output blocks: no wide
        # (C, T) accumulators -> no extra VMEM load/store per element and no
        # large scratch, so big tiles fit comfortably in VMEM on all chips.
        tp_ref[0, 0] += jnp.sum(tp_elem, axis=1, keepdims=True)
        sp_ref[0, 0] += jnp.sum(sp_elem, axis=1, keepdims=True)
        so_ref[0, 0] += jnp.sum(so_elem, axis=1, keepdims=True)

    return kernel


def focal_tversky_loss(inputs, targets, *, tile=32768, n_split=2,
                       smooth=SMOOTH, alpha=ALPHA, beta=BETA, gamma=GAMMA,
                       ignore_index=IGNORE_INDEX):
    """inputs: (B, C, H, W) float logits (f32/bf16); targets: (B, H, W) ints."""
    B, C, H, W = inputs.shape
    HW = H * W

    # Free (contiguous) reshapes — no channel gather, no transpose, NO dtype
    # cast of the big activation tensor in HBM.
    x = inputs.reshape(B, C, HW)
    lbl = targets.reshape(B, 1, HW)
    if lbl.dtype != jnp.int32:
        lbl = lbl.astype(jnp.int32)          # tiny: 1/C of the logits traffic

    # Pixel tile: lane-dense (multiple of 128) unless the whole row fits.
    if HW <= tile:
        T = HW
    else:
        T = max(128, (tile // 128) * 128)
    n_t = pl.cdiv(HW, T)

    # Leading "parallel" split of the pixel-tile axis so both v7x TensorCores
    # get work even for B == 1 (harmless sequential split on 1-core chips).
    n_split = max(1, min(int(n_split), n_t))
    ht = pl.cdiv(n_t, n_split)

    kernel = _make_kernel(C, T, HW, ht, n_t, n_split, list(ignore_index))

    part_shape = jax.ShapeDtypeStruct((n_split, B, C, 1), jnp.float32)
    part_spec = pl.BlockSpec((1, 1, C, 1), lambda s, b, t: (s, b, 0, 0))

    def in_map(s, b, t):
        # Clamp the virtual tile index; over-covered tiles are fully masked
        # inside the kernel via the `pix < HW` check.
        return (b, 0, jnp.minimum(s * ht + t, n_t - 1))

    # VMEM budget: double-buffered logits + labels blocks plus tiny partials.
    itemsize = x.dtype.itemsize
    vmem_need = 2 * C * T * itemsize + 2 * T * 4 + 6 * C * 128 * 4 + (2 << 20)
    vmem_limit = int(min(max(2 * vmem_need, 32 << 20), 56 << 20))

    tp_b, sp_b, so_b = pl.pallas_call(
        kernel,
        out_shape=(part_shape, part_shape, part_shape),
        grid_spec=pltpu.PrefetchScalarGridSpec(
            num_scalar_prefetch=0,
            grid=(n_split, B, ht),
            in_specs=[
                pl.BlockSpec((1, 1, T), in_map),   # labels
                pl.BlockSpec((1, C, T), in_map),   # logits (native dtype)
            ],
            out_specs=(part_spec, part_spec, part_spec),
        ),
        compiler_params=pltpu.CompilerParams(
            # pixel-half and batch axes are independent -> megacore split on
            # v7x; the pixel-tile axis carries the resident output partials.
            dimension_semantics=("parallel", "parallel", "arbitrary"),
            vmem_limit_bytes=vmem_limit),
    )(lbl, x)

    # Final Tversky / focal combine on the tiny (split, B, C) partials.
    TP = jnp.sum(tp_b[:, :, :, 0], axis=(0, 1))
    SP = jnp.sum(sp_b[:, :, :, 0], axis=(0, 1))
    SO = jnp.sum(so_b[:, :, :, 0], axis=(0, 1))
    FP = SP - TP
    FN = SO - TP

    kept = (np.delete(np.arange(C), ignore_index)
            if len(ignore_index) else np.arange(C))
    tp, fp, fn = TP[kept], FP[kept], FN[kept]
    tversky = (tp + smooth) / (tp + alpha * fn + beta * fp + smooth)
    return jnp.sum((1.0 - tversky) ** gamma)


def focal_tversky_ref(inputs, targets):
    """Pure-JAX reference mirroring the PyTorch forward exactly."""
    B, C, H, W = inputs.shape
    kept = np.delete(np.arange(C), IGNORE_INDEX)
    x = inputs.astype(jnp.float32).reshape(B, C, H * W)
    t = jax.nn.one_hot(targets.reshape(B, H * W), C, dtype=jnp.float32)
    x = x[:, jnp.asarray(kept), :]
    t = t[:, :, jnp.asarray(kept)]
    x = jax.nn.softmax(x, axis=1)
    x = jnp.transpose(x, (0, 2, 1)).reshape(-1, kept.shape[0])
    t = t.reshape(-1, kept.shape[0])
    TP = (x * t).sum(0)
    FP = ((1.0 - t) * x).sum(0)
    FN = (t * (1.0 - x)).sum(0)
    tv = (TP + SMOOTH) / (TP + ALPHA * FN + BETA * FP + SMOOTH)
    return ((1.0 - tv) ** GAMMA).sum()


if __name__ == "__main__":
    # ignore_index contains classes 21 and 22 -> need at least 23 classes.
    B, C, H, W = 2, 24, 16, 16
    key = jax.random.PRNGKey(0)
    k1, k2 = jax.random.split(key)
    inputs = jax.random.normal(k1, (B, C, H, W), dtype=jnp.float32)
    targets = jax.random.randint(k2, (B, H, W), 0, C, dtype=jnp.int32)

    # 1) f32, single-tile-per-batch path.
    loss = focal_tversky_loss(inputs, targets)
    jax.block_until_ready(loss)
    ref = focal_tversky_ref(inputs, targets)
    np.testing.assert_allclose(np.asarray(loss), np.asarray(ref),
                               rtol=1e-4, atol=1e-4)

    # 2) Multi-tile + pixel-half split + masked-tail path (H*W = 320, tile=128).
    H2, W2 = 16, 20
    k3, k4 = jax.random.split(k2)
    inputs2 = jax.random.normal(k3, (B, C, H2, W2), dtype=jnp.float32)
    targets2 = jax.random.randint(k4, (B, H2, W2), 0, C, dtype=jnp.int32)
    loss2 = focal_tversky_loss(inputs2, targets2, tile=128)
    jax.block_until_ready(loss2)
    ref2 = focal_tversky_ref(inputs2, targets2)
    np.testing.assert_allclose(np.asarray(loss2), np.asarray(ref2),
                               rtol=1e-4, atol=1e-4)

    # 3) bf16 logits consumed natively (no wrapper-side f32 cast / HBM pre-pass).
    inputs_bf16 = inputs.astype(jnp.bfloat16)
    loss3 = focal_tversky_loss(inputs_bf16, targets)
    jax.block_until_ready(loss3)
    ref3 = focal_tversky_ref(inputs_bf16, targets)   # ref widens the same bf16 values
    np.testing.assert_allclose(np.asarray(loss3), np.asarray(ref3),
                               rtol=1e-4, atol=1e-4)

    print("KERNEL_OK")
</pallas_src>

<mosaic_0001>
module attributes {stable_mosaic.version = 11 : i64} {
  func.func @kernel(%arg0: i32, %arg1: i32, %arg2: i32, %arg3: memref<1x1x256xi32, #tpu.memory_space<vmem>>, %arg4: memref<1x24x256xf32, #tpu.memory_space<vmem>>, %arg5: memref<1x1x24x1xf32, #tpu.memory_space<vmem>>, %arg6: memref<1x1x24x1xf32, #tpu.memory_space<vmem>>, %arg7: memref<1x1x24x1xf32, #tpu.memory_space<vmem>>) attributes {dimension_semantics = [#tpu.dimension_semantics<parallel>, #tpu.dimension_semantics<parallel>, #tpu.dimension_semantics<arbitrary>], iteration_bounds = array<i64: 1, 2, 1>, scalar_prefetch = 0 : i64, scratch_operands = 0 : i64, tpu.core_type = #tpu.core_type<tc>, window_params = [{transform_indices = @transform_0, window_bounds = array<i64: 1, 1, 256>}, {transform_indices = @transform_1, window_bounds = array<i64: 1, 24, 256>}, {transform_indices = @transform_2, window_bounds = array<i64: 1, 1, 24, 1>}, {transform_indices = @transform_3, window_bounds = array<i64: 1, 1, 24, 1>}, {transform_indices = @transform_4, window_bounds = array<i64: 1, 1, 24, 1>}]} {
    %c0_i32 = arith.constant 0 : i32
    %0 = arith.cmpi eq, %arg2, %c0_i32 : i32
    %1 = arith.extui %0 : i1 to i32
    %c0_i32_0 = arith.constant 0 : i32
    %2 = arith.cmpi ne, %1, %c0_i32_0 : i32
    scf.if %2 {
      %cst_38 = arith.constant 0.000000e+00 : f32
      %66 = vector.broadcast %cst_38 : f32 to vector<1x1x24x1xf32>
      %c0_39 = arith.constant 0 : index
      %c0_40 = arith.constant 0 : index
      %c0_41 = arith.constant 0 : index
      %c0_42 = arith.constant 0 : index
      %67 = vector.load %arg5[%c0_39, %c0_40, %c0_41, %c0_42] : memref<1x1x24x1xf32, #tpu.memory_space<vmem>>, vector<1x1x24x1xf32>
      tpu.vector_store %arg5[%c0_39, %c0_40, %c0_41, %c0_42], %66 {strides = array<i32>} : memref<1x1x24x1xf32, #tpu.memory_space<vmem>>, vector<1x1x24x1xf32>,
      %cst_43 = arith.constant 0.000000e+00 : f32
      %68 = vector.broadcast %cst_43 : f32 to vector<1x1x24x1xf32>
      %c0_44 = arith.constant 0 : index
      %c0_45 = arith.constant 0 : index
      %c0_46 = arith.constant 0 : index
      %c0_47 = arith.constant 0 : index
      %69 = vector.load %arg6[%c0_44, %c0_45, %c0_46, %c0_47] : memref<1x1x24x1xf32, #tpu.memory_space<vmem>>, vector<1x1x24x1xf32>
      tpu.vector_store %arg6[%c0_44, %c0_45, %c0_46, %c0_47], %68 {strides = array<i32>} : memref<1x1x24x1xf32, #tpu.memory_space<vmem>>, vector<1x1x24x1xf32>,
      %cst_48 = arith.constant 0.000000e+00 : f32
      %70 = vector.broadcast %cst_48 : f32 to vector<1x1x24x1xf32>
      %c0_49 = arith.constant 0 : index
      %c0_50 = arith.constant 0 : index
      %c0_51 = arith.constant 0 : index
      %c0_52 = arith.constant 0 : index
      %71 = vector.load %arg7[%c0_49, %c0_50, %c0_51, %c0_52] : memref<1x1x24x1xf32, #tpu.memory_space<vmem>>, vector<1x1x24x1xf32>
      tpu.vector_store %arg7[%c0_49, %c0_50, %c0_51, %c0_52], %70 {strides = array<i32>} : memref<1x1x24x1xf32, #tpu.memory_space<vmem>>, vector<1x1x24x1xf32>,
    } else {
    }
    %c0 = arith.constant 0 : index
    %c0_1 = arith.constant 0 : index
    %c0_2 = arith.constant 0 : index
    %3 = vector.load %arg4[%c0, %c0_1, %c0_2] : memref<1x24x256xf32, #tpu.memory_space<vmem>>, vector<1x24x256xf32>
    %4 = vector.shape_cast %3 : vector<1x24x256xf32> to vector<24x256xf32>
    %c0_3 = arith.constant 0 : index
    %c0_4 = arith.constant 0 : index
    %c0_5 = arith.constant 0 : index
    %5 = vector.load %arg3[%c0_3, %c0_4, %c0_5] : memref<1x1x256xi32, #tpu.memory_space<vmem>>, vector<1x1x256xi32>
    %6 = vector.shape_cast %5 : vector<1x1x256xi32> to vector<1x256xi32>
    %7 = tpu.iota {dimensions = array<i32: 0>} : vector<24x1xi32>
    %c0_i32_6 = arith.constant 0 : i32
    %8 = vector.broadcast %c0_i32_6 : i32 to vector<24x1xi32>
    %9 = arith.cmpi sge, %7, %8 : vector<24x1xi32>
    %c0_i32_7 = arith.constant 0 : i32
    %10 = vector.broadcast %c0_i32_7 : i32 to vector<24x1xi32>
    %11 = arith.cmpi ne, %7, %10 : vector<24x1xi32>
    %12 = arith.andi %9, %11 : vector<24x1xi1>
    %c21_i32 = arith.constant 21 : i32
    %13 = vector.broadcast %c21_i32 : i32 to vector<24x1xi32>
    %14 = arith.cmpi ne, %7, %13 : vector<24x1xi32>
    %15 = arith.andi %12, %14 : vector<24x1xi1>
    %c22_i32 = arith.constant 22 : i32
    %16 = vector.broadcast %c22_i32 : i32 to vector<24x1xi32>
    %17 = arith.cmpi ne, %7, %16 : vector<24x1xi32>
    %18 = arith.andi %15, %17 : vector<24x1xi1>
    %c-1_i32 = arith.constant -1 : i32
    %19 = vector.broadcast %c-1_i32 : i32 to vector<24x1xi32>
    %20 = arith.select %18, %7, %19 : vector<24x1xi1>, vector<24x1xi32>
    %cst = arith.constant 0xFF800000 : f32
    %21 = vector.shape_cast %18 : vector<24x1xi1> to vector<24x1xi1>
    %22 = vector.broadcast %21 : vector<24x1xi1> to vector<24x256xi1>
    %23 = vector.broadcast %cst : f32 to vector<24x256xf32>
    %24 = arith.select %22, %4, %23 : vector<24x256xi1>, vector<24x256xf32>
    %cst_8 = arith.constant dense<0xFF800000> : vector<256xf32>
    %25 = vector.multi_reduction <maximumf>, %24, %cst_8 [0] : vector<24x256xf32> to vector<256xf32>
    %26 = vector.shape_cast %25 : vector<256xf32> to vector<1x256xf32>
    %27 = vector.broadcast %26 : vector<1x256xf32> to vector<24x256xf32>
    %28 = arith.subf %24, %27 : vector<24x256xf32>
    %29 = math.exp %28 : vector<24x256xf32>
    %cst_9 = arith.constant dense<0.000000e+00> : vector<256xf32>
    %30 = vector.multi_reduction <add>, %29, %cst_9 [0] : vector<24x256xf32> to vector<256xf32>
    %31 = vector.shape_cast %30 : vector<256xf32> to vector<1x256xf32>
    %32 = tpu.reciprocal %31 : vector<1x256xf32> -> vector<1x256xf32>
    %33 = vector.broadcast %32 : vector<1x256xf32> to vector<24x256xf32>
    %34 = arith.mulf %29, %33 : vector<24x256xf32>
    %35 = vector.broadcast %20 : vector<24x1xi32> to vector<24x256xi32>
    %36 = vector.broadcast %6 : vector<1x256xi32> to vector<24x256xi32>
    %37 = arith.cmpi eq, %35, %36 : vector<24x256xi32>
    %cst_10 = arith.constant 0.000000e+00 : f32
    %38 = vector.broadcast %cst_10 : f32 to vector<24x256xf32>
    %39 = arith.select %37, %34, %38 : vector<24x256xi1>, vector<24x256xf32>
    %40 = arith.extui %37 : vector<24x256xi1> to vector<24x256xi32>
    %41 = arith.sitofp %40 : vector<24x256xi32> to vector<24x256xf32>
    %c0_11 = arith.constant 0 : index
    %c0_12 = arith.constant 0 : index
    %c0_13 = arith.constant 0 : index
    %c0_14 = arith.constant 0 : index
    %42 = vector.load %arg5[%c0_11, %c0_12, %c0_13, %c0_14] : memref<1x1x24x1xf32, #tpu.memory_space<vmem>>, vector<1x1x24x1xf32>
    %43 = vector.shape_cast %42 : vector<1x1x24x1xf32> to vector<24x1xf32>
    %cst_15 = arith.constant dense<0.000000e+00> : vector<24xf32>
    %44 = vector.multi_reduction <add>, %39, %cst_15 [1] : vector<24x256xf32> to vector<24xf32>
    %45 = vector.shape_cast %44 : vector<24xf32> to vector<24x1xf32>
    %46 = arith.addf %43, %45 : vector<24x1xf32>
    %c0_16 = arith.constant 0 : index
    %c0_17 = arith.constant 0 : index
    %c0_18 = arith.constant 0 : index
    %c0_19 = arith.constant 0 : index
    %47 = vector.load %arg5[%c0_16, %c0_17, %c0_18, %c0_19] : memref<1x1x24x1xf32, #tpu.memory_space<vmem>>, vector<1x1x24x1xf32>
    %48 = vector.shape_cast %47 : vector<1x1x24x1xf32> to vector<24x1xf32>
    %49 = vector.shape_cast %46 : vector<24x1xf32> to vector<1x1x24x1xf32>
    tpu.vector_store %arg5[%c0_16, %c0_17, %c0_18, %c0_19], %49 {strides = array<i32>} : memref<1x1x24x1xf32, #tpu.memory_space<vmem>>, vector<1x1x24x1xf32>,
    %c0_20 = arith.constant 0 : index
    %c0_21 = arith.constant 0 : index
    %c0_22 = arith.constant 0 : index
    %c0_23 = arith.constant 0 : index
    %50 = vector.load %arg6[%c0_20, %c0_21, %c0_22, %c0_23] : memref<1x1x24x1xf32, #tpu.memory_space<vmem>>, vector<1x1x24x1xf32>
    %51 = vector.shape_cast %50 : vector<1x1x24x1xf32> to vector<24x1xf32>
    %cst_24 = arith.constant dense<0.000000e+00> : vector<24xf32>
    %52 = vector.multi_reduction <add>, %34, %cst_24 [1] : vector<24x256xf32> to vector<24xf32>
    %53 = vector.shape_cast %52 : vector<24xf32> to vector<24x1xf32>
    %54 = arith.addf %51, %53 : vector<24x1xf32>
    %c0_25 = arith.constant 0 : index
    %c0_26 = arith.constant 0 : index
    %c0_27 = arith.constant 0 : index
    %c0_28 = arith.constant 0 : index
    %55 = vector.load %arg6[%c0_25, %c0_26, %c0_27, %c0_28] : memref<1x1x24x1xf32, #tpu.memory_space<vmem>>, vector<1x1x24x1xf32>
    %56 = vector.shape_cast %55 : vector<1x1x24x1xf32> to vector<24x1xf32>
    %57 = vector.shape_cast %54 : vector<24x1xf32> to vector<1x1x24x1xf32>
    tpu.vector_store %arg6[%c0_25, %c0_26, %c0_27, %c0_28], %57 {strides = array<i32>} : memref<1x1x24x1xf32, #tpu.memory_space<vmem>>, vector<1x1x24x1xf32>,
    %c0_29 = arith.constant 0 : index
    %c0_30 = arith.constant 0 : index
    %c0_31 = arith.constant 0 : index
    %c0_32 = arith.constant 0 : index
    %58 = vector.load %arg7[%c0_29, %c0_30, %c0_31, %c0_32] : memref<1x1x24x1xf32, #tpu.memory_space<vmem>>, vector<1x1x24x1xf32>
    %59 = vector.shape_cast %58 : vector<1x1x24x1xf32> to vector<24x1xf32>
    %cst_33 = arith.constant dense<0.000000e+00> : vector<24xf32>
    %60 = vector.multi_reduction <add>, %41, %cst_33 [1] : vector<24x256xf32> to vector<24xf32>
    %61 = vector.shape_cast %60 : vector<24xf32> to vector<24x1xf32>
    %62 = arith.addf %59, %61 : vector<24x1xf32>
    %c0_34 = arith.constant 0 : index
    %c0_35 = arith.constant 0 : index
    %c0_36 = arith.constant 0 : index
    %c0_37 = arith.constant 0 : index
    %63 = vector.load %arg7[%c0_34, %c0_35, %c0_36, %c0_37] : memref<1x1x24x1xf32, #tpu.memory_space<vmem>>, vector<1x1x24x1xf32>
    %64 = vector.shape_cast %63 : vector<1x1x24x1xf32> to vector<24x1xf32>
    %65 = vector.shape_cast %62 : vector<24x1xf32> to vector<1x1x24x1xf32>
    tpu.vector_store %arg7[%c0_34, %c0_35, %c0_36, %c0_37], %65 {strides = array<i32>} : memref<1x1x24x1xf32, #tpu.memory_space<vmem>>, vector<1x1x24x1xf32>,
    return
  }
  func.func @transform_0(%arg0: i32, %arg1: i32, %arg2: i32) -> (i32, i32, i32) {
    %c1_i32 = arith.constant 1 : i32
    %0 = arith.muli %arg0, %c1_i32 : i32
    %1 = arith.addi %0, %arg2 : i32
    %c0_i32 = arith.constant 0 : i32
    %2 = arith.minsi %1, %c0_i32 : i32
    %c0_i32_0 = arith.constant 0 : i32
    %c0_i32_1 = arith.constant 0 : i32
    return %arg1, %c0_i32_0, %2 : i32, i32, i32
  }
  func.func @transform_1(%arg0: i32, %arg1: i32, %arg2: i32) -> (i32, i32, i32) {
    %c1_i32 = arith.constant 1 : i32
    %0 = arith.muli %arg0, %c1_i32 : i32
    %1 = arith.addi %0, %arg2 : i32
    %c0_i32 = arith.constant 0 : i32
    %2 = arith.minsi %1, %c0_i32 : i32
    %c0_i32_0 = arith.constant 0 : i32
    %c0_i32_1 = arith.constant 0 : i32
    return %arg1, %c0_i32_0, %2 : i32, i32, i32
  }
  func.func @transform_2(%arg0: i32, %arg1: i32, %arg2: i32) -> (i32, i32, i32, i32) {
    %c0_i32 = arith.constant 0 : i32
    %c0_i32_0 = arith.constant 0 : i32
    %c0_i32_1 = arith.constant 0 : i32
    return %arg0, %arg1, %c0_i32, %c0_i32_0 : i32, i32, i32, i32
  }
  func.func @transform_3(%arg0: i32, %arg1: i32, %arg2: i32) -> (i32, i32, i32, i32) {
    %c0_i32 = arith.constant 0 : i32
    %c0_i32_0 = arith.constant 0 : i32
    %c0_i32_1 = arith.constant 0 : i32
    return %arg0, %arg1, %c0_i32, %c0_i32_0 : i32, i32, i32, i32
  }
  func.func @transform_4(%arg0: i32, %arg1: i32, %arg2: i32) -> (i32, i32, i32, i32) {
    %c0_i32 = arith.constant 0 : i32
    %c0_i32_0 = arith.constant 0 : i32
    %c0_i32_1 = arith.constant 0 : i32
    return %arg0, %arg1, %c0_i32, %c0_i32_0 : i32, i32, i32, i32
  }
}

</mosaic_0001>

<llo_original>
// kernel: tpu_custom_call.1
$region0: #{tpu_custom_call.1}
  #allocation0 [shape = 'u32[]', space=smem, size = 0x4, offset = 0x4, fixed_abs, tag = 'smem constant byte address 0x4 - core index']
  #allocation1 [shape = 'u32[72,128]{1,0:T(1,128)}', space=vmem, size = 0x9000, scoped, tag = 'internal scratch']
  %s0 = inlined_call_operand.hbm [shape: s32[2,1,256], index: 0, kind: input, shape index: {}]
  %s1 = inlined_call_operand.hbm [shape: f32[2,24,256], index: 1, kind: input, shape index: {}]
  %s2 = inlined_call_operand.vmem [shape: f32[1,2,24,1], index: 2, kind: output, shape index: {0}]
  %s3 = inlined_call_operand.vmem [shape: f32[1,2,24,1], index: 3, kind: output, shape index: {1}]
  %s4 = inlined_call_operand.vmem [shape: f32[1,2,24,1], index: 4, kind: output, shape index: {2}]
  %5 = xla_tuple %s2, %s3, %s4
  %s6 = sld [smem:[#allocation0]]
  $region69: #{tpu_custom_call.1} parent=0
    _
  %s8 = ssub.s32 1, %s6
  %s9 = scalar_select 0, %s8, %s6
  $region1: #{tpu_custom_call.1} parent=0
    #allocation2 [shape = 'u8[2048]{0}', space=vmem, size = 0x800, scoped, tag = 'input window, operand 0']
    #allocation3 [shape = 's32[2]{0}', space=sflag, size = 0x8, scoped, tag = 'scoped memory for tpu_custom_call.1']
    #allocation4 [shape = 'u8[49152]{0}', space=vmem, size = 0xc000, scoped, tag = 'input window, operand 1']
    #allocation5 [shape = 's32[2]{0}', space=sflag, size = 0x8, scoped, tag = 'scoped memory for tpu_custom_call.1']
    %10 = vsyncpa [#allocation3], 0
    %s11 = scalar_lea.sflag [#allocation3], 1
    %12 = vsyncpa %s11, 0
    %13 = vsyncpa [#allocation5], 0
    %s14 = scalar_lea.sflag [#allocation5], 1
    %15 = vsyncpa %s14, 0
    loop: start=0, step=1, limit=4
    $region2: #{tpu_custom_call.1} parent=1 // loop_pre_header
      _
    $region3: #{tpu_custom_call.1} parent=1 // loop_header
      %s17 = sphi 0, %s21
      %p18 = scmp.ge.s32.totalorder %s17, 4
      %s24 = sphi 0, %s43
      %s25 = sphi 0, %s39
      %s26 = sphi 0, %s35
      %s27 = sphi 0, %s24
      %s28 = sphi 0, %s25
      %s29 = sphi 0, %s26
      %s30 = sphi 0, %s27
      %s31 = sphi 0, %s28
      %s32 = sphi 0, %s29
      %s54 = sphi 0, %s56
      %s57 = sphi 0, %s54
      %s58 = sphi 0, %s57
      %s74 = sphi 0, %s58
      %s88 = sphi 0, %s90
      %s91 = sphi 0, %s88
      %s92 = sphi 0, %s91
      %s108 = sphi 0, %s92
      %s116 = sphi 0, %s118
      %s119 = sphi 0, %s116
      %s120 = sphi 0, %s119
      %s136 = sphi 0, %s120
      %s144 = sphi 0, %s146
      %s147 = sphi 0, %s144
      %s148 = sphi 0, %s147
      %s164 = sphi 0, %s148
      %s172 = sphi 0, %s174
      %s175 = sphi 0, %s172
      %s176 = sphi 0, %s175
      %s192 = sphi 0, %s176
    $region4: #{tpu_custom_call.1} parent=1 // loop_header_branch
      %20 = sbr.rel (%p18) target = $region8
    $region5: #{tpu_custom_call.1} parent=1 // loop_body
      %s22 = ssub.s32 %s17, 1
      %s23 = ssub.s32 %s17, 2
      %s33 = sadd.s32 1, %s26
      %p34 = scmp.ge.s32.totalorder %s33, 1
      %s35 = scalar_select %p34, 0, %s33
      %s36 = sadd.s32 1, %s25
      %s37 = scalar_select %p34, %s36, %s25
      %p38 = scmp.ge.s32.totalorder %s37, 2
      %s39 = scalar_select %p38, 0, %s37
      %s40 = sadd.s32 1, %s24
      %s41 = scalar_select %p38, %s40, %s24
      %p42 = scmp.ge.s32.totalorder %s41, 1
      %s43 = scalar_select %p42, 0, %s41
      %s44 = sadd.s32 %s24, %s26
      %p45 = scmp.lt.s32.totalorder %s44, 0
      %s46 = scalar_select %p45, %s44, 0
      %s47 = sadd.s32 %s43, %s35
      %p48 = scmp.lt.s32.totalorder %s47, 0
      %s49 = scalar_select %p48, %s47, 0
      %s50 = ssub.s32 %s25, %s39
      %s51 = ssub.s32 %s46, %s49
      %s52 = sor.u32 %s50, %s51
      %p53 = scmp.eq.s32.totalorder %s52, 0
      %s55 = sadd.s32 %s54, 1
      %s56 = scalar_select %p53, %s54, %s55
      %p59 = pneg %p53
      %p60 = scmp.eq.s32.totalorder %s17, 1
      %p61 = por %p59, %p60
      %p62 = scmp.ne.s32.totalorder %s54, %s57
      %p63 = scmp.eq.s32.totalorder %s17, 0
      %p64 = por %p62, %p63
      %p65 = scmp.ne.s32.totalorder %s54, %s57
      %p66 = scmp.eq.s32.totalorder %s22, 1
      %p67 = por %p65, %p66
      %p68 = scmp.ne.s32.totalorder %s57, %s58
      %p69 = scmp.eq.s32.totalorder %s22, 0
      %p70 = por %p68, %p69
      %p71 = scmp.ne.s32.totalorder %s57, %s58
      %p72 = scmp.eq.s32.totalorder %s23, 1
      %p73 = por %p71, %p72
      %p75 = scmp.ne.s32.totalorder %s58, %s74
      %p76 = scmp.eq.s32.totalorder %s23, 0
      %p77 = por %p75, %p76
      %s78 = sadd.s32 %s24, %s26
      %p79 = scmp.lt.s32.totalorder %s78, 0
      %s80 = scalar_select %p79, %s78, 0
      %s81 = sadd.s32 %s43, %s35
      %p82 = scmp.lt.s32.totalorder %s81, 0
      %s83 = scalar_select %p82, %s81, 0
      %s84 = ssub.s32 %s25, %s39
      %s85 = ssub.s32 %s80, %s83
      %s86 = sor.u32 %s84, %s85
      %p87 = scmp.eq.s32.totalorder %s86, 0
      %s89 = sadd.s32 %s88, 1
      %s90 = scalar_select %p87, %s88, %s89
      %p93 = pneg %p87
      %p94 = scmp.eq.s32.totalorder %s17, 1
      %p95 = por %p93, %p94
      %p96 = scmp.ne.s32.totalorder %s88, %s91
      %p97 = scmp.eq.s32.totalorder %s17, 0
      %p98 = por %p96, %p97
      %p99 = scmp.ne.s32.totalorder %s88, %s91
      %p100 = scmp.eq.s32.totalorder %s22, 1
      %p101 = por %p99, %p100
      %p102 = scmp.ne.s32.totalorder %s91, %s92
      %p103 = scmp.eq.s32.totalorder %s22, 0
      %p104 = por %p102, %p103
      %p105 = scmp.ne.s32.totalorder %s91, %s92
      %p106 = scmp.eq.s32.totalorder %s23, 1
      %p107 = por %p105, %p106
      %p109 = scmp.ne.s32.totalorder %s92, %s108
      %p110 = scmp.eq.s32.totalorder %s23, 0
      %p111 = por %p109, %p110
      %s112 = ssub.s32 %s24, %s43
      %s113 = ssub.s32 %s25, %s39
      %s114 = sor.u32 %s112, %s113
      %p115 = scmp.eq.s32.totalorder %s114, 0
      %s117 = sadd.s32 %s116, 1
      %s118 = scalar_select %p115, %s116, %s117
      %p121 = pneg %p115
      %p122 = scmp.eq.s32.totalorder %s17, 1
      %p123 = por %p121, %p122
      %p124 = scmp.ne.s32.totalorder %s116, %s119
      %p125 = scmp.eq.s32.totalorder %s17, 0
      %p126 = por %p124, %p125
      %p127 = scmp.ne.s32.totalorder %s116, %s119
      %p128 = scmp.eq.s32.totalorder %s22, 1
      %p129 = por %p127, %p128
      %p130 = scmp.ne.s32.totalorder %s119, %s120
      %p131 = scmp.eq.s32.totalorder %s22, 0
      %p132 = por %p130, %p131
      %p133 = scmp.ne.s32.totalorder %s119, %s120
      %p134 = scmp.eq.s32.totalorder %s23, 1
      %p135 = por %p133, %p134
      %p137 = scmp.ne.s32.totalorder %s120, %s136
      %p138 = scmp.eq.s32.totalorder %s23, 0
      %p139 = por %p137, %p138
      %s140 = ssub.s32 %s24, %s43
      %s141 = ssub.s32 %s25, %s39
      %s142 = sor.u32 %s140, %s141
      %p143 = scmp.eq.s32.totalorder %s142, 0
      %s145 = sadd.s32 %s144, 1
      %s146 = scalar_select %p143, %s144, %s145
      %p149 = pneg %p143
      %p150 = scmp.eq.s32.totalorder %s17, 1
      %p151 = por %p149, %p150
      %p152 = scmp.ne.s32.totalorder %s144, %s147
      %p153 = scmp.eq.s32.totalorder %s17, 0
      %p154 = por %p152, %p153
      %p155 = scmp.ne.s32.totalorder %s144, %s147
      %p156 = scmp.eq.s32.totalorder %s22, 1
      %p157 = por %p155, %p156
      %p158 = scmp.ne.s32.totalorder %s147, %s148
      %p159 = scmp.eq.s32.totalorder %s22, 0
      %p160 = por %p158, %p159
      %p161 = scmp.ne.s32.totalorder %s147, %s148
      %p162 = scmp.eq.s32.totalorder %s23, 1
      %p163 = por %p161, %p162
      %p165 = scmp.ne.s32.totalorder %s148, %s164
      %p166 = scmp.eq.s32.totalorder %s23, 0
      %p167 = por %p165, %p166
      %s168 = ssub.s32 %s24, %s43
      %s169 = ssub.s32 %s25, %s39
      %s170 = sor.u32 %s168, %s169
      %p171 = scmp.eq.s32.totalorder %s170, 0
      %s173 = sadd.s32 %s172, 1
      %s174 = scalar_select %p171, %s172, %s173
      %p177 = pneg %p171
      %p178 = scmp.eq.s32.totalorder %s17, 1
      %p179 = por %p177, %p178
      %p180 = scmp.ne.s32.totalorder %s172, %s175
      %p181 = scmp.eq.s32.totalorder %s17, 0
      %p182 = por %p180, %p181
      %p183 = scmp.ne.s32.totalorder %s172, %s175
      %p184 = scmp.eq.s32.totalorder %s22, 1
      %p185 = por %p183, %p184
      %p186 = scmp.ne.s32.totalorder %s175, %s176
      %p187 = scmp.eq.s32.totalorder %s22, 0
      %p188 = por %p186, %p187
      %p189 = scmp.ne.s32.totalorder %s175, %s176
      %p190 = scmp.eq.s32.totalorder %s23, 1
      %p191 = por %p189, %p190
      %p193 = scmp.ne.s32.totalorder %s176, %s192
      %p194 = scmp.eq.s32.totalorder %s23, 0
      %p195 = por %p193, %p194
      %p196 = scmp.le.s32.totalorder 1, %s17
      %p197 = scmp.lt.s32.totalorder %s17, 3
      %p198 = pnand %p196, %p197
      %p199 = pneg %p198
      // Predicated region
      $region9: #{tpu_custom_call.1} parent=5 // pred_check
        _
      $region10: #{tpu_custom_call.1} parent=5 // pred_check_branch
        %201 = sbr.rel (%p198) target = $region12
      $region11: #{tpu_custom_call.1} parent=5 // pred_region
        %s202 = ssub.s32 %s17, 1
      $region12: #{tpu_custom_call.1} parent=5 // pred_fallthru
        _
      %p203 = scmp.lt.s32.totalorder %s17, 2
      // Predicated region
      $region13: #{tpu_custom_call.1} parent=5 // pred_check
        %p204 = pneg %p203
      $region14: #{tpu_custom_call.1} parent=5 // pred_check_branch
        %206 = sbr.rel (%p204) target = $region16
      $region15: #{tpu_custom_call.1} parent=5 // pred_region
        // Predicated region
        $region17: #{tpu_custom_call.1} parent=15 // pred_check
          %p207 = pneg %p64
        $region18: #{tpu_custom_call.1} parent=15 // pred_check_branch
          %209 = sbr.rel (%p207) target = $region20
        $region19: #{tpu_custom_call.1} parent=15 // pred_region
          %s210 = sand.u32 %s54, 1
          %s211 = scalar_lea.sflag [#allocation3], %s210
          %s212 = sand.u32 %s54, 1
          %s213 = smul.addr %s212, 2
          %s214 = scalar_lea.vmem [#allocation2], %s213
          %s215 = sadd.s32 %s24, %s26
          %p216 = scmp.lt.s32.totalorder %s215, 0
          %s217 = scalar_select %p216, %s215, 0
          %s218 = smul.u32 2, %s217
          %220 = vsyncadd %s211, 0
          %s221 = smul.addr %s25, 2
          %s222 = sadd.s32 %s218, %s221
          %s223 = scalar_lea.hbm %s0, %s222
          %s225 = sshll.u32 %s223, 4
          %s226 = int_to_ptr.hbm [resolvable:$true] %s225
          %s227 = sshll.u32 %s214, 4
          %s228 = int_to_ptr.vmem [resolvable:$true] %s227
          %230 = dma.hbm_to_vmem [thread:$0]  %s226, 32, %s228, %s211
        $region20: #{tpu_custom_call.1} parent=15 // pred_fallthru
          _
        // Predicated region
        $region21: #{tpu_custom_call.1} parent=15 // pred_check
          %p231 = pneg %p98
        $region22: #{tpu_custom_call.1} parent=15 // pred_check_branch
          %233 = sbr.rel (%p231) target = $region24
        $region23: #{tpu_custom_call.1} parent=15 // pred_region
          %s234 = sand.u32 %s88, 1
          %s235 = scalar_lea.sflag [#allocation5], %s234
          %s236 = sand.u32 %s88, 1
          %s237 = smul.addr %s236, 48
          %s238 = scalar_lea.vmem [#allocation4], %s237
          %s239 = sadd.s32 %s24, %s26
          %p240 = scmp.lt.s32.totalorder %s239, 0
          %s241 = scalar_select %p240, %s239, 0
          %s242 = smul.u32 2, %s241
          %244 = vsyncadd %s235, 0
          %s245 = smul.addr %s25, 6
          %s246 = sadd.s32 %s242, %s245
          %s247 = smul.addr %s246, 8
          %s248 = scalar_lea.hbm %s1, %s247
          %s249 = sshll.u32 %s248, 4
          %s250 = int_to_ptr.hbm [resolvable:$true] %s249
          %s251 = sshll.u32 %s238, 4
          %s252 = int_to_ptr.vmem [resolvable:$true] %s251
          %257 = dma.hbm_to_vmem [thread:$0]  %s250, 768, %s252, %s235, 256, 256, 16
        $region24: #{tpu_custom_call.1} parent=15 // pred_fallthru
          _
      $region16: #{tpu_custom_call.1} parent=5 // pred_fallthru
        _
      %p258 = scmp.le.s32.totalorder 1, %s17
      %p259 = scmp.lt.s32.totalorder %s17, 3
      %p260 = pnand %p258, %p259
      %p261 = pneg %p260
      // Predicated region
      $region25: #{tpu_custom_call.1} parent=5 // pred_check
        _
      $region26: #{tpu_custom_call.1} parent=5 // pred_check_branch
        %263 = sbr.rel (%p260) target = $region28
      $region27: #{tpu_custom_call.1} parent=5 // pred_region
        %s264 = ssub.s32 %s17, 1
        %s265 = sand.u32 %s57, 1
        %s266 = scalar_lea.sflag [#allocation3], %s265
        %s267 = sand.u32 %s57, 1
        %s268 = smul.addr %s267, 2
        %s269 = scalar_lea.vmem [#allocation2], %s268
        // Predicated region
        $region29: #{tpu_custom_call.1} parent=27 // pred_check
          %p270 = pneg %p70
        $region30: #{tpu_custom_call.1} parent=27 // pred_check_branch
          %272 = sbr.rel (%p270) target = $region32
        $region31: #{tpu_custom_call.1} parent=27 // pred_region
          %274 = dma.done %s266, 32
        $region32: #{tpu_custom_call.1} parent=27 // pred_fallthru
          _
        %s275 = sand.u32 %s91, 1
        %s276 = scalar_lea.sflag [#allocation5], %s275
        %s277 = sand.u32 %s91, 1
        %s278 = smul.addr %s277, 48
        %s279 = scalar_lea.vmem [#allocation4], %s278
        // Predicated region
        $region33: #{tpu_custom_call.1} parent=27 // pred_check
          %p280 = pneg %p104
        $region34: #{tpu_custom_call.1} parent=27 // pred_check_branch
          %282 = sbr.rel (%p280) target = $region36
        $region35: #{tpu_custom_call.1} parent=27 // pred_region
          %284 = dma.done %s276, 768
        $region36: #{tpu_custom_call.1} parent=27 // pred_fallthru
          _
        %s285 = sand.u32 %s57, 1
        %s286 = scalar_lea.sflag [#allocation3], %s285
        %s287 = sand.u32 %s57, 1
        %s288 = smul.addr %s287, 2
        %s289 = scalar_lea.vmem [#allocation2], %s288
        %p290 = pneg %p70
        %p291 = pneg %p67
        %s292 = sand.u32 %s91, 1
        %s293 = scalar_lea.sflag [#allocation5], %s292
        %s294 = sand.u32 %s91, 1
        %s295 = smul.addr %s294, 48
        %s296 = scalar_lea.vmem [#allocation4], %s295
        %p297 = pneg %p104
        %p298 = pneg %p101
        %p299 = pneg %p132
        %p300 = pneg %p129
        %p301 = scmp.lt.s32.totalorder %s27, 0
        %s302 = scalar_select %p301, %s27, 0
        %p303 = scmp.lt.s32.totalorder %s28, 1
        %s304 = scalar_select %p303, %s28, 1
        %s305 = smul.addr %s304, 3
        %s306 = smul.addr %s302, 6
        %s307 = sadd.s32 %s305, %s306
        %s308 = smul.addr %s307, 8
        %s309 = scalar_lea.vmem %s2, %s308
        %p310 = pneg %p160
        %p311 = pneg %p157
        %p312 = scmp.lt.s32.totalorder %s27, 0
        %s313 = scalar_select %p312, %s27, 0
        %p314 = scmp.lt.s32.totalorder %s28, 1
        %s315 = scalar_select %p314, %s28, 1
        %s316 = smul.addr %s315, 3
        %s317 = smul.addr %s313, 6
        %s318 = sadd.s32 %s316, %s317
        %s319 = smul.addr %s318, 8
        %s320 = scalar_lea.vmem %s3, %s319
        %p321 = pneg %p188
        %p322 = pneg %p185
        %p323 = scmp.lt.s32.totalorder %s27, 0
        %s324 = scalar_select %p323, %s27, 0
        %p325 = scmp.lt.s32.totalorder %s28, 1
        %s326 = scalar_select %p325, %s28, 1
        %s327 = smul.addr %s326, 3
        %s328 = smul.addr %s324, 6
        %s329 = sadd.s32 %s327, %s328
        %s330 = smul.addr %s329, 8
        %s331 = scalar_lea.vmem %s4, %s330
        %s332 = sadd.s32 %s27, %s29
        %p333 = scmp.lt.s32.totalorder %s332, 0
        %s334 = scalar_select %p333, %s332, 0
        %s335 = smul.u32 2, %s334
        %s336 = sadd.s32 %s27, %s29
        %p337 = scmp.lt.s32.totalorder %s336, 0
        %s338 = scalar_select %p337, %s336, 0
        %s339 = smul.u32 2, %s338
        %p340 = scmp.lt.s32.totalorder %s27, 0
        %s341 = scalar_select %p340, %s27, 0
        %p342 = scmp.lt.s32.totalorder %s28, 1
        %s343 = scalar_select %p342, %s28, 1
        %s344 = smul.addr %s343, 3
        %s345 = smul.addr %s341, 6
        %s346 = sadd.s32 %s344, %s345
        %s347 = smul.addr %s346, 8
        %s348 = scalar_lea.vmem %s2, %s347
        %p349 = scmp.lt.s32.totalorder %s27, 0
        %s350 = scalar_select %p349, %s27, 0
        %p351 = scmp.lt.s32.totalorder %s28, 1
        %s352 = scalar_select %p351, %s28, 1
        %s353 = smul.addr %s352, 3
        %s354 = smul.addr %s350, 6
        %s355 = sadd.s32 %s353, %s354
        %s356 = smul.addr %s355, 8
        %s357 = scalar_lea.vmem %s3, %s356
        %p358 = scmp.lt.s32.totalorder %s27, 0
        %s359 = scalar_select %p358, %s27, 0
        %p360 = scmp.lt.s32.totalorder %s28, 1
        %s361 = scalar_select %p360, %s28, 1
        %s362 = smul.addr %s361, 3
        %s363 = smul.addr %s359, 6
        %s364 = sadd.s32 %s362, %s363
        %s365 = smul.addr %s364, 8
        %s366 = scalar_lea.vmem %s4, %s365
        %p367 = scmp.eq.s32.totalorder %s29, 0
        // Predicated region
        $region37: #{tpu_custom_call.1} parent=27 // pred_check
          %p368 = pneg %p367
        $region38: #{tpu_custom_call.1} parent=27 // pred_check_branch
          %370 = sbr.rel (%p368) target = $region40
        $region39: #{tpu_custom_call.1} parent=27 // pred_region
          %vm371 = vcmask 7168
          %372 = vst.msk [vmem:[%s348] sm:$0xff] %vm371, 0.0
          %373 = vst.msk [vmem:[%s348 + $0x8] sm:$0xff] %vm371, 0.0
          %374 = vst.msk [vmem:[%s348 + $0x10] sm:$0xff] %vm371, 0.0
          %375 = vst.msk [vmem:[%s357] sm:$0xff] %vm371, 0.0
          %376 = vst.msk [vmem:[%s357 + $0x8] sm:$0xff] %vm371, 0.0
          %377 = vst.msk [vmem:[%s357 + $0x10] sm:$0xff] %vm371, 0.0
          %378 = vst.msk [vmem:[%s366] sm:$0xff] %vm371, 0.0
          %379 = vst.msk [vmem:[%s366 + $0x8] sm:$0xff] %vm371, 0.0
          %380 = vst.msk [vmem:[%s366 + $0x10] sm:$0xff] %vm371, 0.0
        $region40: #{tpu_custom_call.1} parent=27 // pred_fallthru
          _
        %v381 = vld [vmem:[%s279] sm:$0xff]
        %v382 = vld [vmem:[%s279 + $0x8] sm:$0xff]
        %v383 = vld [vmem:[%s279 + $0x10] sm:$0xff]
        %v384 = vld [vmem:[%s279 + $0x18] sm:$0xff]
        %v385 = vld [vmem:[%s279 + $0x20] sm:$0xff]
        %v386 = vld [vmem:[%s279 + $0x28] sm:$0xff]
        %v387 = vld [vmem:[%s269] sm:$0x3]
        %v388 = vlaneseq
        %v389 = vshrl.u32 %v388, 7
        %v390 = vadd.s32 %v389, 8
        %v391 = vadd.s32 %v389, 16
        %vm392 = vcmp.ge.s32.totalorder %v389, 0
        %vm393 = vcmp.ge.s32.totalorder %v390, 0
        %vm394 = vcmp.ge.s32.totalorder %v391, 0
        %vm395 = vcmp.ne.s32.totalorder %v389, 0
        %vm396 = vcmp.ne.s32.totalorder %v390, 0
        %vm397 = vcmp.ne.s32.totalorder %v391, 0
        %vm398 = vmand %vm392, %vm395
        %vm399 = vmand %vm393, %vm396
        %vm400 = vmand %vm394, %vm397
        %vm401 = vcmp.ne.s32.totalorder %v389, 21
        %vm402 = vcmp.ne.s32.totalorder %v390, 21
        %vm403 = vcmp.ne.s32.totalorder %v391, 21
        %vm404 = vmand %vm398, %vm401
        %vm405 = vmand %vm399, %vm402
        %vm406 = vmand %vm400, %vm403
        %vm407 = vcmp.ne.s32.totalorder %v389, 22
        %vm408 = vcmp.ne.s32.totalorder %v390, 22
        %vm409 = vcmp.ne.s32.totalorder %v391, 22
        %vm410 = vmand %vm404, %vm407
        %vm411 = vmand %vm405, %vm408
        %vm412 = vmand %vm406, %vm409
        %v413 = vsel %vm410, %v389, 4294967295
        %v414 = vsel %vm411, %v390, 4294967295
        %v415 = vsel %vm412, %v391, 4294967295
        %v416 = vsel %vm410, 1, 0
        %v417 = vsel %vm411, 1, 0
        %v418 = vsel %vm412, 1, 0
        %vm419 = vcmp.eq.s32.totalorder %v416, 1
        %vm420 = vcmp.eq.s32.totalorder %v417, 1
        %vm421 = vcmp.eq.s32.totalorder %v418, 1
        %v422 = vsel %vm419, %v381, -inf
        %v423 = vsel %vm419, %v382, -inf
        %v424 = vsel %vm420, %v383, -inf
        %v425 = vsel %vm420, %v384, -inf
        %v426 = vsel %vm421, %v385, -inf
        %v427 = vsel %vm421, %v386, -inf
        %v428 = vmax.f32 %v422, %v426
        %v429 = vmax.f32 %v428, %v424
        %v430 = vrot.slane %v429, 4
        %v431 = vmax.f32 %v429, %v430
        %v432 = vrot.slane %v431, 2
        %v433 = vmax.f32 %v431, %v432
        %v434 = vrot.slane %v433, 1
        %v435 = vmax.f32 %v433, %v434
        %v436 = vmax.f32 %v423, %v427
        %v437 = vmax.f32 %v436, %v425
        %v438 = vrot.slane %v437, 4
        %v439 = vmax.f32 %v437, %v438
        %v440 = vrot.slane %v439, 2
        %v441 = vmax.f32 %v439, %v440
        %v442 = vrot.slane %v441, 1
        %v443 = vmax.f32 %v441, %v442
        %v444 = vsub.f32 %v422, %v435
        %v445 = vsub.f32 %v423, %v443
        %v446 = vsub.f32 %v424, %v435
        %v447 = vsub.f32 %v425, %v443
        %v448 = vsub.f32 %v426, %v435
        %v449 = vsub.f32 %v427, %v443
        %v450 = vmul.f32 %v444, 1.442695
        %v451 = vpow.pop %v450
        %v452 = vmul.f32 %v445, 1.442695
        %v453 = vpow.pop %v452
        %v454 = vmul.f32 %v446, 1.442695
        %v455 = vpow.pop %v454
        %v456 = vmul.f32 %v447, 1.442695
        %v457 = vpow.pop %v456
        %v458 = vmul.f32 %v448, 1.442695
        %v459 = vpow.pop %v458
        %v460 = vmul.f32 %v449, 1.442695
        %v461 = vpow.pop %v460
        %v462 = vadd.f32 %v451, %v455
        %v463 = vadd.f32 %v462, %v459
        %v464 = vrot.slane %v463, 4
        %v465 = vadd.f32 %v463, %v464
        %v466 = vrot.slane %v465, 2
        %v467 = vadd.f32 %v465, %v466
        %v468 = vrot.slane %v467, 1
        %v469 = vadd.f32 %v467, %v468
        %v470 = vadd.f32 %v453, %v457
        %v471 = vadd.f32 %v470, %v461
        %v472 = vrot.slane %v471, 4
        %v473 = vadd.f32 %v471, %v472
        %v474 = vrot.slane %v473, 2
        %v475 = vadd.f32 %v473, %v474
        %v476 = vrot.slane %v475, 1
        %v477 = vadd.f32 %v475, %v476
        %v478 = vrcp.pop %v469
        %v479 = vmul.f32 %v469, %v478
        %v480 = vsub.f32 1.0, %v479
        %v481 = vmul.f32 %v478, %v480
        %v482 = vadd.f32 %v478, %v481
        %vm483 = vweird.f32 %v469
        %vm484 = vweird.f32 %v478
        %vm485 = vmor %vm483, %vm484
        %v486 = vsel %vm485, %v478, %v482
        %v487 = vand.u32 2147483647, %v469
        %vm488 = vcmp.eq.f32.partialorder %v487, 8.507059e+37
        %v489 = vand.u32 %v469, 2147483648
        %v490 = vor.u32 1.1754944e-38, %v489
        %v491 = vsel %vm488, %v490, %v486
        %v492 = vrcp.pop %v477
        %v493 = vmul.f32 %v477, %v492
        %v494 = vsub.f32 1.0, %v493
        %v495 = vmul.f32 %v492, %v494
        %v496 = vadd.f32 %v492, %v495
        %vm497 = vweird.f32 %v477
        %vm498 = vweird.f32 %v492
        %vm499 = vmor %vm497, %vm498
        %v500 = vsel %vm499, %v492, %v496
        %v501 = vand.u32 2147483647, %v477
        %vm502 = vcmp.eq.f32.partialorder %v501, 8.507059e+37
        %v503 = vand.u32 %v477, 2147483648
        %v504 = vor.u32 1.1754944e-38, %v503
        %v505 = vsel %vm502, %v504, %v500
        %v506 = vmul.f32 %v451, %v491
        %v507 = vmul.f32 %v453, %v505
        %v508 = vmul.f32 %v455, %v491
        %v509 = vmul.f32 %v457, %v505
        %v510 = vmul.f32 %v459, %v491
        %v511 = vmul.f32 %v461, %v505
        %v512 = vperm.slane %v387, 0
        %v513 = vperm.slane %v387, 1
        %vm514 = vcmp.eq.s32.totalorder %v413, %v512
        %vm515 = vcmp.eq.s32.totalorder %v413, %v513
        %vm516 = vcmp.eq.s32.totalorder %v414, %v512
        %vm517 = vcmp.eq.s32.totalorder %v414, %v513
        %vm518 = vcmp.eq.s32.totalorder %v415, %v512
        %vm519 = vcmp.eq.s32.totalorder %v415, %v513
        %v520 = vsel %vm514, %v506, 0.0
        %v521 = vsel %vm515, %v507, 0.0
        %v522 = vsel %vm516, %v508, 0.0
        %v523 = vsel %vm517, %v509, 0.0
        %v524 = vsel %vm518, %v510, 0.0
        %v525 = vsel %vm519, %v511, 0.0
        %v526 = vsel %vm514, 1, 0
        %v527 = vsel %vm515, 1, 0
        %v528 = vsel %vm516, 1, 0
        %v529 = vsel %vm517, 1, 0
        %v530 = vsel %vm518, 1, 0
        %v531 = vsel %vm519, 1, 0
        %v532 = vcvt.s32.f32 %v526
        %v533 = vcvt.s32.f32 %v527
        %v534 = vcvt.s32.f32 %v528
        %v535 = vcvt.s32.f32 %v529
        %v536 = vcvt.s32.f32 %v530
        %v537 = vcvt.s32.f32 %v531
        %v538 = vld [vmem:[%s348] sm:$0xff]
        %v539 = vld [vmem:[%s348 + $0x8] sm:$0xff]
        %v540 = vld [vmem:[%s348 + $0x10] sm:$0xff]
        %v541 = vadd.f32 %v520, %v521
        %542 = vadd.xlane.f32.xlu0 %v541
        %v543 = vpop.xlane.xlu0 %542
        %v544 = vadd.f32 %v522, %v523
        %545 = vadd.xlane.f32.xlu0 %v544
        %v546 = vpop.xlane.xlu0 %545
        %v547 = vadd.f32 %v524, %v525
        %548 = vadd.xlane.f32.xlu0 %v547
        %v549 = vpop.xlane.xlu0 %548
        %v550 = vadd.f32 %v538, %v543
        %v551 = vadd.f32 %v539, %v546
        %v552 = vadd.f32 %v540, %v549
        %vm553 = vcmask 7168
        %554 = vst.msk [vmem:[%s348] sm:$0xff] %vm553, %v550
        %555 = vst.msk [vmem:[%s348 + $0x8] sm:$0xff] %vm553, %v551
        %556 = vst.msk [vmem:[%s348 + $0x10] sm:$0xff] %vm553, %v552
        %v557 = vld [vmem:[%s357] sm:$0xff]
        %v558 = vld [vmem:[%s357 + $0x8] sm:$0xff]
        %v559 = vld [vmem:[%s357 + $0x10] sm:$0xff]
        %v560 = vadd.f32 %v506, %v507
        %561 = vadd.xlane.f32.xlu0 %v560
        %v562 = vpop.xlane.xlu0 %561
        %v563 = vadd.f32 %v508, %v509
        %564 = vadd.xlane.f32.xlu0 %v563
        %v565 = vpop.xlane.xlu0 %564
        %v566 = vadd.f32 %v510, %v511
        %567 = vadd.xlane.f32.xlu0 %v566
        %v568 = vpop.xlane.xlu0 %567
        %v569 = vadd.f32 %v557, %v562
        %v570 = vadd.f32 %v558, %v565
        %v571 = vadd.f32 %v559, %v568
        %572 = vst.msk [vmem:[%s357] sm:$0xff] %vm553, %v569
        %573 = vst.msk [vmem:[%s357 + $0x8] sm:$0xff] %vm553, %v570
        %574 = vst.msk [vmem:[%s357 + $0x10] sm:$0xff] %vm553, %v571
        %v575 = vld [vmem:[%s366] sm:$0xff]
        %v576 = vld [vmem:[%s366 + $0x8] sm:$0xff]
        %v577 = vld [vmem:[%s366 + $0x10] sm:$0xff]
        %v578 = vadd.f32 %v532, %v533
        %579 = vadd.xlane.f32.xlu0 %v578
        %v580 = vpop.xlane.xlu0 %579
        %v581 = vadd.f32 %v534, %v535
        %582 = vadd.xlane.f32.xlu0 %v581
        %v583 = vpop.xlane.xlu0 %582
        %v584 = vadd.f32 %v536, %v537
        %585 = vadd.xlane.f32.xlu0 %v584
        %v586 = vpop.xlane.xlu0 %585
        %v587 = vadd.f32 %v575, %v580
        %v588 = vadd.f32 %v576, %v583
        %v589 = vadd.f32 %v577, %v586
        %590 = vst.msk [vmem:[%s366] sm:$0xff] %vm553, %v587
        %591 = vst.msk [vmem:[%s366 + $0x8] sm:$0xff] %vm553, %v588
        %592 = vst.msk [vmem:[%s366 + $0x10] sm:$0xff] %vm553, %v589
        %p593 = scmp.lt.s32.totalorder %s27, 0
        %s594 = scalar_select %p593, %s27, 0
        %p595 = scmp.lt.s32.totalorder %s28, 1
        %s596 = scalar_select %p595, %s28, 1
        %s597 = smul.addr %s596, 3
        %s598 = smul.addr %s594, 6
        %s599 = sadd.s32 %s597, %s598
        %s600 = smul.addr %s599, 8
        %s601 = scalar_lea.vmem %s2, %s600
        %p602 = scmp.lt.s32.totalorder %s27, 0
        %s603 = scalar_select %p602, %s27, 0
        %p604 = scmp.lt.s32.totalorder %s28, 1
        %s605 = scalar_select %p604, %s28, 1
        %s606 = smul.addr %s605, 3
        %s607 = smul.addr %s603, 6
        %s608 = sadd.s32 %s606, %s607
        %s609 = smul.addr %s608, 8
        %s610 = scalar_lea.vmem %s3, %s609
        %p611 = scmp.lt.s32.totalorder %s27, 0
        %s612 = scalar_select %p611, %s27, 0
        %p613 = scmp.lt.s32.totalorder %s28, 1
        %s614 = scalar_select %p613, %s28, 1
        %s615 = smul.addr %s614, 3
        %s616 = smul.addr %s612, 6
        %s617 = sadd.s32 %s615, %s616
        %s618 = smul.addr %s617, 8
        %s619 = scalar_lea.vmem %s4, %s618
        // Predicated region
        $region41: #{tpu_custom_call.1} parent=27 // pred_check
          %p620 = pneg %p129
        $region42: #{tpu_custom_call.1} parent=27 // pred_check_branch
          %622 = sbr.rel (%p620) target = $region44
        $region43: #{tpu_custom_call.1} parent=27 // pred_region
          _
        $region44: #{tpu_custom_call.1} parent=27 // pred_fallthru
          _
        // Predicated region
        $region45: #{tpu_custom_call.1} parent=27 // pred_check
          %p623 = pneg %p157
        $region46: #{tpu_custom_call.1} parent=27 // pred_check_branch
          %625 = sbr.rel (%p623) target = $region48
        $region47: #{tpu_custom_call.1} parent=27 // pred_region
          _
        $region48: #{tpu_custom_call.1} parent=27 // pred_fallthru
          _
        // Predicated region
        $region49: #{tpu_custom_call.1} parent=27 // pred_check
          %p626 = pneg %p185
        $region50: #{tpu_custom_call.1} parent=27 // pred_check_branch
          %628 = sbr.rel (%p626) target = $region52
        $region51: #{tpu_custom_call.1} parent=27 // pred_region
          _
        $region52: #{tpu_custom_call.1} parent=27 // pred_fallthru
          _
      $region28: #{tpu_custom_call.1} parent=5 // pred_fallthru
        _
      %p629 = scmp.le.s32.totalorder 2, %s17
      // Predicated region
      $region53: #{tpu_custom_call.1} parent=5 // pred_check
        %p630 = pneg %p629
      $region54: #{tpu_custom_call.1} parent=5 // pred_check_branch
        %632 = sbr.rel (%p630) target = $region56
      $region55: #{tpu_custom_call.1} parent=5 // pred_region
        %s633 = ssub.s32 %s17, 2
        // Predicated region
        $region57: #{tpu_custom_call.1} parent=55 // pred_check
          %p634 = pneg %p135
        $region58: #{tpu_custom_call.1} parent=55 // pred_check_branch
          %636 = sbr.rel (%p634) target = $region60
        $region59: #{tpu_custom_call.1} parent=55 // pred_region
          %p637 = scmp.lt.s32.totalorder %s30, 0
          %s638 = scalar_select %p637, %s30, 0
          %p639 = scmp.lt.s32.totalorder %s31, 1
          %s640 = scalar_select %p639, %s31, 1
          %s641 = smul.addr %s640, 3
          %s642 = smul.addr %s638, 6
          %s643 = sadd.s32 %s641, %s642
          %s644 = smul.addr %s643, 8
          %s645 = scalar_lea.vmem %s2, %s644
        $region60: #{tpu_custom_call.1} parent=55 // pred_fallthru
          _
        // Predicated region
        $region61: #{tpu_custom_call.1} parent=55 // pred_check
          %p646 = pneg %p163
        $region62: #{tpu_custom_call.1} parent=55 // pred_check_branch
          %648 = sbr.rel (%p646) target = $region64
        $region63: #{tpu_custom_call.1} parent=55 // pred_region
          %p649 = scmp.lt.s32.totalorder %s30, 0
          %s650 = scalar_select %p649, %s30, 0
          %p651 = scmp.lt.s32.totalorder %s31, 1
          %s652 = scalar_select %p651, %s31, 1
          %s653 = smul.addr %s652, 3
          %s654 = smul.addr %s650, 6
          %s655 = sadd.s32 %s653, %s654
          %s656 = smul.addr %s655, 8
          %s657 = scalar_lea.vmem %s3, %s656
        $region64: #{tpu_custom_call.1} parent=55 // pred_fallthru
          _
        // Predicated region
        $region65: #{tpu_custom_call.1} parent=55 // pred_check
          %p658 = pneg %p191
        $region66: #{tpu_custom_call.1} parent=55 // pred_check_branch
          %660 = sbr.rel (%p658) target = $region68
        $region67: #{tpu_custom_call.1} parent=55 // pred_region
          %p661 = scmp.lt.s32.totalorder %s30, 0
          %s662 = scalar_select %p661, %s30, 0
          %p663 = scmp.lt.s32.totalorder %s31, 1
          %s664 = scalar_select %p663, %s31, 1
          %s665 = smul.addr %s664, 3
          %s666 = smul.addr %s662, 6
          %s667 = sadd.s32 %s665, %s666
          %s668 = smul.addr %s667, 8
          %s669 = scalar_lea.vmem %s4, %s668
        $region68: #{tpu_custom_call.1} parent=55 // pred_fallthru
          _
      $region56: #{tpu_custom_call.1} parent=5 // pred_fallthru
        _
    $region6: #{tpu_custom_call.1} parent=1 // loop_footer
      %s21 = sadd.s32 1, %s17
    $region7: #{tpu_custom_call.1} parent=1 // loop_footer_branch
      %16 = sbr.rel target = $region3
    $region8: #{tpu_custom_call.1} parent=1 // loop_exit
      _
    %670 = vsyncpa [#allocation3], 1
    %s671 = scalar_lea.sflag [#allocation3], 1
    %672 = vsyncpa %s671, 1
    %673 = vsyncpa [#allocation5], 1
    %s674 = scalar_lea.sflag [#allocation5], 1
    %675 = vsyncpa %s674, 1

</llo_original>
